<compile_context>
chip_gen: v6e
topology: v6e:2x2x1
jax: 0.10.0
libtpu: 0.0.40
codegen_flags: <defaults>
</compile_context>

<pallas_src>
import math

import jax
import jax.numpy as jnp
from jax.experimental import pallas as pl
from jax.experimental.pallas import tpu as pltpu


# -----------------------------------------------------------------------------
# Base-net definition (shapes only) — a tiny 2-layer MLP, like a BMAML base net.
#   fc1.weight (32, 8), fc1.bias (32,), fc2.weight (4, 32), fc2.bias (4,)
# -----------------------------------------------------------------------------
PARAMETER_SHAPES = [(32, 8), (32,), (4, 32), (4,)]
NUM_PARTICLES = 3  # must be >= 2 (module raises otherwise)

LANES = 128
SUBLANES = 8


def _flat_size(shapes):
    return int(sum(math.prod(s) for s in shapes))


def _padded_rows(num_base_params):
    rows = pl.cdiv(num_base_params, LANES)
    rows = pl.cdiv(rows, SUBLANES) * SUBLANES
    return int(rows)


# -----------------------------------------------------------------------------
# Pallas kernel: gather B particle slabs, one direct HBM->HBM DMA per grid step.
# -----------------------------------------------------------------------------
def _gather_particles_kernel(idx_ref, params_hbm, out_hbm, sem):
    # idx_ref: (B,) int32 in SMEM (scalar prefetch)
    # params_hbm: (num_particles, rows, 128) in HBM (pl.ANY)
    # out_hbm:    (B, rows, 128) in HBM (pl.ANY)
    b = pl.program_id(0)
    idx = idx_ref[b]
    cp = pltpu.make_async_copy(params_hbm.at[idx], out_hbm.at[b], sem)
    cp.start()
    cp.wait()


def select_particles(params_bank: jax.Array, particle_idx: jax.Array) -> jax.Array:
    """params_bank: (num_particles, rows, 128) f32; particle_idx: (B,) int.

    Returns (B, rows, 128) f32: out[b] = params_bank[particle_idx[b]].
    """
    num_particles, rows, lanes = params_bank.shape
    assert lanes == LANES and rows % SUBLANES == 0

    # Guard against out-of-range indices before they reach the DMA.
    particle_idx = jnp.clip(particle_idx.astype(jnp.int32), 0, num_particles - 1)
    batch = particle_idx.shape[0]

    grid_spec = pltpu.PrefetchScalarGridSpec(
        num_scalar_prefetch=1,
        grid=(batch,),
        in_specs=[pl.BlockSpec(memory_space=pl.ANY)],   # raw HBM ref, manual DMA
        out_specs=pl.BlockSpec(memory_space=pl.ANY),    # write via DMA, no staging
        scratch_shapes=[pltpu.SemaphoreType.DMA(())],
    )

    return pl.pallas_call(
        _gather_particles_kernel,
        grid_spec=grid_spec,
        out_shape=jax.ShapeDtypeStruct((batch, rows, LANES), params_bank.dtype),
        compiler_params=pltpu.CompilerParams(
            dimension_semantics=("arbitrary",),
        ),
    )(particle_idx, params_bank)


# -----------------------------------------------------------------------------
# EnsembleNet in JAX
# -----------------------------------------------------------------------------
class EnsembleNetJax:
    def __init__(self, parameter_shapes, num_models, key):
        if num_models <= 1:
            raise ValueError("Minimum number of particles is 2.")
        self.num_particles = num_models
        self.parameter_shapes = list(parameter_shapes)
        self.num_base_params = _flat_size(self.parameter_shapes)
        self.rows = _padded_rows(self.num_base_params)

        # Deterministic particle initialization (stand-in for
        # intialize_parameters + parameters_to_vector).
        flat = jax.random.normal(
            key, (self.num_particles, self.num_base_params), dtype=jnp.float32
        )
        pad = self.rows * LANES - self.num_base_params
        flat_padded = jnp.pad(flat, ((0, 0), (0, pad)))
        # layout: (num_particles, rows, 128) lane-dense slabs in HBM
        self.params_bank = flat_padded.reshape(self.num_particles, self.rows, LANES)

    # vector_to_list_parameters: split + reshape (glue, plain JAX)
    # TODO(synk): a lane-aligned per-parameter bank layout would make this a
    # zero-copy view; kept flat here to match parameters_to_vector semantics.
    def _unflatten(self, vec):
        out, offset = [], 0
        for shape in self.parameter_shapes:
            n = math.prod(shape)
            out.append(vec[offset : offset + n].reshape(shape))
            offset += n
        return out

    def forward(self, i):
        """Returns the list of parameter tensors for particle i (module semantics)."""
        i_arr = jnp.atleast_1d(jnp.asarray(i, dtype=jnp.int32))
        slab = select_particles(self.params_bank, i_arr)[0]   # (rows, 128) via Pallas
        vec = slab.reshape(-1)[: self.num_base_params]        # drop padding (glue)
        return self._unflatten(vec)

    def forward_batched(self, indices):
        """Gather several particles in one kernel launch (amortizes fixed cost)."""
        idx = jnp.asarray(indices, dtype=jnp.int32)
        slabs = select_particles(self.params_bank, idx)        # (B, rows, 128)
        vecs = slabs.reshape(idx.shape[0], -1)[:, : self.num_base_params]
        return [self._unflatten(vecs[b]) for b in range(idx.shape[0])]

    # pure-JAX reference (no Pallas) for correctness checking
    def forward_ref(self, i):
        vec = self.params_bank[i].reshape(-1)[: self.num_base_params]
        return self._unflatten(vec)


if __name__ == "__main__":
    key = jax.random.PRNGKey(0)
    net = EnsembleNetJax(PARAMETER_SHAPES, num_models=NUM_PARTICLES, key=key)

    ok = True

    # Single-particle forward (matches torch module's forward(i)).
    particle_index = 1
    params_list = jax.block_until_ready(net.forward(particle_index))
    ref_list = net.forward_ref(particle_index)
    for got, ref, shape in zip(params_list, ref_list, PARAMETER_SHAPES):
        ok &= got.shape == tuple(shape)
        ok &= bool(jnp.allclose(got, ref))

    # Batched selection: all particles in one pallas_call launch.
    all_lists = jax.block_until_ready(net.forward_batched(list(range(NUM_PARTICLES))))
    for i in range(NUM_PARTICLES):
        ref_list = net.forward_ref(i)
        for got, ref, shape in zip(all_lists[i], ref_list, PARAMETER_SHAPES):
            ok &= got.shape == tuple(shape)
            ok &= bool(jnp.allclose(got, ref))

    assert ok, "Pallas EnsembleNet forward mismatch vs reference"
    print("KERNEL_OK")
</pallas_src>

<mosaic_0001>
module attributes {stable_mosaic.version = 11 : i64} {
  func.func @_gather_particles_kernel(%arg0: i32, %arg1: memref<1xi32, #tpu.memory_space<smem>>, %arg2: memref<3x8x128xf32, #tpu.memory_space<any>>, %arg3: memref<1x8x128xf32, #tpu.memory_space<any>>, %arg4: memref<!tpu.dma_semaphore, #tpu.memory_space<semaphore_mem>>) attributes {dimension_semantics = [#tpu.dimension_semantics<arbitrary>], iteration_bounds = array<i64: 1>, scalar_prefetch = 1 : i64, scratch_operands = 1 : i64, tpu.core_type = #tpu.core_type<tc>, window_params = [{}, {}]} {
    %0 = arith.index_cast %arg0 : i32 to index
    %1 = memref.load %arg1[%0] : memref<1xi32, #tpu.memory_space<smem>>
    %c0_i32 = arith.constant 0 : i32
    %c0_i32_0 = arith.constant 0 : i32
    %2 = tpu.memref_slice %arg2[%1, %c0_i32, %c0_i32_0] : memref<3x8x128xf32, #tpu.memory_space<any>> -> memref<1x8x128xf32, #tpu.memory_space<any>>
    %3 = tpu.memref_squeeze %2 : memref<1x8x128xf32, #tpu.memory_space<any>> -> memref<8x128xf32, #tpu.memory_space<any>>
    %c0_i32_1 = arith.constant 0 : i32
    %c0_i32_2 = arith.constant 0 : i32
    %4 = tpu.memref_slice %arg3[%arg0, %c0_i32_1, %c0_i32_2] : memref<1x8x128xf32, #tpu.memory_space<any>> -> memref<1x8x128xf32, #tpu.memory_space<any>>
    %5 = tpu.memref_squeeze %4 : memref<1x8x128xf32, #tpu.memory_space<any>> -> memref<8x128xf32, #tpu.memory_space<any>>
    tpu.enqueue_dma source(%3 : memref<8x128xf32, #tpu.memory_space<any>>) target(%5 : memref<8x128xf32, #tpu.memory_space<any>>) target_semaphore(%arg4 : memref<!tpu.dma_semaphore, #tpu.memory_space<semaphore_mem>>)
    %c0_i32_3 = arith.constant 0 : i32
    %c0_i32_4 = arith.constant 0 : i32
    %6 = tpu.memref_slice %arg2[%1, %c0_i32_3, %c0_i32_4] : memref<3x8x128xf32, #tpu.memory_space<any>> -> memref<1x8x128xf32, #tpu.memory_space<any>>
    %7 = tpu.memref_squeeze %6 : memref<1x8x128xf32, #tpu.memory_space<any>> -> memref<8x128xf32, #tpu.memory_space<any>>
    %c0_i32_5 = arith.constant 0 : i32
    %c0_i32_6 = arith.constant 0 : i32
    %8 = tpu.memref_slice %arg3[%arg0, %c0_i32_5, %c0_i32_6] : memref<1x8x128xf32, #tpu.memory_space<any>> -> memref<1x8x128xf32, #tpu.memory_space<any>>
    %9 = tpu.memref_squeeze %8 : memref<1x8x128xf32, #tpu.memory_space<any>> -> memref<8x128xf32, #tpu.memory_space<any>>
    tpu.wait_dma2 semaphore(%arg4 : memref<!tpu.dma_semaphore, #tpu.memory_space<semaphore_mem>>) src(%7 : memref<8x128xf32, #tpu.memory_space<any>>) dst(%9 : memref<8x128xf32, #tpu.memory_space<any>>)
    return
  }
}

</mosaic_0001>

<llo_original>
// kernel: tpu_custom_call.1
$region0: #{tpu_custom_call.1}
  #allocation0 [shape = 'u32[]', space=smem, size = 0x4, offset = 0x4, fixed_abs, tag = 'smem constant byte address 0x4 - core index']
  #allocation1 [shape = 'u32[144,128]{1,0:T(1,128)}', space=vmem, size = 0x12000, scoped, tag = 'internal scratch']
  #allocation2 [shape = 's32[1]{0}', space=sflag, size = 0x4, scoped, tag = 'scratch operand']
  #allocation3 [shape = 's32[1]{0}', space=sflag, size = 0x4, scoped, tag = 'scoped memory for tpu_custom_call.1']
  #allocation4 [shape = 's32[1]{0:T(128)S(6)}', space=smem, size = 0x200, scoped, tag = 'prefetched SMEM operand 0']
  #allocation5 [shape = 's32[]', space=sflag, size = 0x4, offset = 0, fixed_abs, tag = 'sflag constant byte address 0x0 - dummy sync flag']
  #allocation6 [shape = 'u32[0]{0}', space=smem, size = 0, offset = 0, fixed_abs, tag = 'smem constant byte address 0x0 - null']
  %s0 = inlined_call_operand.<no memory space> [shape: s32[1], index: 0, kind: input, shape index: {}]
  %s1 = inlined_call_operand.hbm [shape: f32[3,8,128], index: 1, kind: input, shape index: {}]
  %s2 = inlined_call_operand.hbm [shape: f32[1,8,128], index: 2, kind: output, shape index: {}]
  %s3 = sld [smem:[#allocation0]]
  $region2: #{tpu_custom_call.1} parent=0
    _
  %s5 = ssub.s32 1, %s3
  %s6 = scalar_select 0, %s5, %s3
  %7 = sst [smem:[#allocation4]] %s0
  %s8 = sld [smem:[#allocation4]]
  %s9 = smul.u32 %s8, 8
  %s10 = smul.addr %s9, 16
  %s11 = scalar_lea.hbm %s1, %s10
  %s12 = smul.u32 0, 8
  %s13 = smul.addr %s12, 16
  %s14 = scalar_lea.hbm %s2, %s13
  %s16 = sshll.u32 1, 14
  %s17 = sxor.u32 4294967295, %s16
  %21 = dma.general %s11, 128, %s14, [#allocation2], 131072, [#allocation6], 0, 0
  %s22 = smul.u32 8, 1
  %s23 = sshll.u32 %s22, 4
  %24 = dma.done [#allocation2], %s23
  %25 = vsyncmov [#allocation2]
  %s26 = vpop.sfrf %25
  %p27 = scmp.eq.s32.totalorder %s26, 0
  %p28 = pneg %p27
  %30 = shalt.err (%p28)

</llo_original>
